<compile_context>
chip_gen: v5e
topology: v5e:2x2
jax: 0.10.0
libtpu: 0.0.40
codegen_flags: <defaults>
</compile_context>

<pallas_src>
import math

import jax
import jax.numpy as jnp
from jax.experimental import pallas as pl
from jax.experimental.pallas import tpu as pltpu

SAMPLES_DIM = 2
EMBEDDING_DIM = 5
CLASS_NUM = 9
HIDDEN_DIM = 16
INPUT_DIM = SAMPLES_DIM + 1 + EMBEDDING_DIM   # x (2) + t (1) + emb (5) = 8
LEAKY_SLOPE = 0.01                            # PyTorch nn.LeakyReLU default

MAX_TILE_B = 32768                            # batch lanes per grid step
LANE_CHUNK = 2048                             # lanes per in-register chunk


def _leaky_relu(x, slope=LEAKY_SLOPE):
    return jnp.where(x > 0, x, slope * x)


def _round_up(v, m):
    return (v + m - 1) // m * m


def diffusion_mlp_kernel(inp_ref, w0_ref, b0_ref, w1_ref, b1_ref,
                         w2_ref, b2_ref, w3_ref, b3_ref, out_ref):
    """Blocks are (chunks_per_tile, features, chunk); batch lives on lanes.

    Weights are VMEM-resident f32, cast once per grid step to bf16 for the MXU.
    Each chunk's 4-layer chain is computed fully in registers and stored
    lane-dense into its (2, chunk) output slice.
    """
    n_chunks = inp_ref.shape[0]                       # static Python int

    # Cast weights to bf16 once per grid step (hoisted out of the chunk loop).
    w0 = w0_ref[...].astype(jnp.bfloat16)             # (16, 8)
    w1 = w1_ref[...].astype(jnp.bfloat16)             # (16, 16)
    w2 = w2_ref[...].astype(jnp.bfloat16)             # (16, 16)
    w3 = w3_ref[...].astype(jnp.bfloat16)             # (2, 16)
    b0 = b0_ref[...]                                   # (16, 1) f32
    b1 = b1_ref[...]
    b2 = b2_ref[...]
    b3 = b3_ref[...]                                   # (2, 1) f32

    # Static chunk loop: fully visible to the scheduler, no spilled
    # (16, tile) intermediates -- each chunk's chain stays in vregs.
    for ci in range(n_chunks):
        xin = inp_ref[ci].astype(jnp.bfloat16)         # (8, chunk)
        h = jnp.dot(w0, xin, preferred_element_type=jnp.float32) + b0
        h = _leaky_relu(h)
        h = jnp.dot(w1, h.astype(jnp.bfloat16),
                    preferred_element_type=jnp.float32) + b1
        h = _leaky_relu(h)
        h = jnp.dot(w2, h.astype(jnp.bfloat16),
                    preferred_element_type=jnp.float32) + b2
        h = _leaky_relu(h)
        out = jnp.dot(w3, h.astype(jnp.bfloat16),
                      preferred_element_type=jnp.float32) + b3
        out_ref[ci] = out.astype(out_ref.dtype)        # (2, chunk), lane-dense


def init_params(key):
    """Deterministic synthetic parameters mimicking PyTorch default inits."""
    keys = jax.random.split(key, 16)

    def linear(kw, kb, fan_in, fan_out):
        bound = 1.0 / math.sqrt(fan_in)
        w = jax.random.uniform(kw, (fan_in, fan_out), jnp.float32, -bound, bound)
        b = jax.random.uniform(kb, (1, fan_out), jnp.float32, -bound, bound)
        return w, b

    emb = jax.random.normal(keys[0], (CLASS_NUM, EMBEDDING_DIM), jnp.float32)
    w0, b0 = linear(keys[1], keys[2], INPUT_DIM, HIDDEN_DIM)
    w1, b1 = linear(keys[3], keys[4], HIDDEN_DIM, HIDDEN_DIM)
    w2, b2 = linear(keys[5], keys[6], HIDDEN_DIM, HIDDEN_DIM)
    w3, b3 = linear(keys[7], keys[8], HIDDEN_DIM, SAMPLES_DIM)
    return {"emb": emb,
            "w0": w0, "b0": b0, "w1": w1, "b1": b1,
            "w2": w2, "b2": b2, "w3": w3, "b3": b3}


def _choose_tiling(b):
    """Grid-balanced tile: n steps = cdiv(B, MAX_TILE_B), tile split evenly."""
    n_steps = max(1, pl.cdiv(b, MAX_TILE_B))
    tile = _round_up(pl.cdiv(b, n_steps), 128)
    chunk = min(tile, LANE_CHUNK)
    tile = _round_up(tile, chunk)                      # tile % chunk == 0
    b_pad = _round_up(b, tile)
    return tile, chunk, b_pad


def diffusion_forward(params, x, t, c):
    """x: (B, 2) f32, t: (B, 1) f32, c: (B, 1) int32 class ids -> (B, 2) f32."""
    b = x.shape[0]
    tile, chunk, b_pad = _choose_tiling(b)
    chunks_per_tile = tile // chunk
    n_chunks_total = b_pad // chunk
    grid = (b_pad // tile,)

    # Wrapper-side prep: gather the class embedding, build the single merged
    # (chunks, 8, chunk) input slab with the batch on the lane axis.
    # TODO(synk): if the caller can supply (features, batch) layout directly,
    # this relayout (one pass over the input) disappears.
    cemb = jnp.take(params["emb"], c.reshape(-1), axis=0)            # (B, 5)
    inp = jnp.concatenate([x.astype(jnp.float32),
                           t.astype(jnp.float32),
                           cemb], axis=1)                             # (B, 8)
    inp = jnp.pad(inp, ((0, b_pad - b), (0, 0)))                      # (b_pad, 8)
    inp3 = inp.reshape(n_chunks_total, chunk, INPUT_DIM).transpose(0, 2, 1)

    # Pre-transposed f32 weights (cast to bf16 inside the kernel).
    w0_t = params["w0"].T                                             # (16, 8)
    b0 = params["b0"].reshape(-1, 1)                                  # (16, 1)
    w1_t, b1 = params["w1"].T, params["b1"].reshape(-1, 1)
    w2_t, b2 = params["w2"].T, params["b2"].reshape(-1, 1)
    w3_t, b3 = params["w3"].T, params["b3"].reshape(-1, 1)

    def stream_spec(rows):
        # Blocked along the chunk (leading) axis; pipelined by the grid.
        return pl.BlockSpec((chunks_per_tile, rows, chunk), lambda i: (i, 0, 0))

    def resident_spec(shape):
        # Same block every grid step -> stays resident in VMEM.
        return pl.BlockSpec(shape, lambda i: (0, 0))

    out3 = pl.pallas_call(
        diffusion_mlp_kernel,
        out_shape=jax.ShapeDtypeStruct(
            (n_chunks_total, SAMPLES_DIM, chunk), jnp.float32),
        grid=grid,
        in_specs=[
            stream_spec(INPUT_DIM),                    # merged [x,t,emb] stream
            resident_spec((HIDDEN_DIM, INPUT_DIM)),    # w0^T
            resident_spec((HIDDEN_DIM, 1)),            # b0
            resident_spec((HIDDEN_DIM, HIDDEN_DIM)),   # w1^T
            resident_spec((HIDDEN_DIM, 1)),            # b1
            resident_spec((HIDDEN_DIM, HIDDEN_DIM)),   # w2^T
            resident_spec((HIDDEN_DIM, 1)),            # b2
            resident_spec((SAMPLES_DIM, HIDDEN_DIM)),  # w3^T
            resident_spec((SAMPLES_DIM, 1)),           # b3
        ],
        out_specs=stream_spec(SAMPLES_DIM),
        compiler_params=pltpu.CompilerParams(
            dimension_semantics=("parallel",),         # shards across TCs on v7x
            vmem_limit_bytes=32 * 1024 * 1024),
    )(inp3, w0_t, b0, w1_t, b1, w2_t, b2, w3_t, b3)

    # (chunks, 2, chunk) -> (b_pad, 2) -> strip padded lanes.
    return out3.transpose(0, 2, 1).reshape(b_pad, SAMPLES_DIM)[:b]


def diffusion_forward_ref(params, x, t, c):
    """Pure-JAX f32 reference (standard (batch, features) layout)."""
    cemb = jnp.take(params["emb"], c.reshape(-1), axis=0).reshape(-1, EMBEDDING_DIM)
    inp = jnp.concatenate([x, t, cemb], axis=1)
    h = _leaky_relu(inp @ params["w0"] + params["b0"])
    h = _leaky_relu(h @ params["w1"] + params["b1"])
    h = _leaky_relu(h @ params["w2"] + params["b2"])
    return h @ params["w3"] + params["b3"]


def _check(params, key, batch):
    k_x, k_t, k_c = jax.random.split(key, 3)
    x = jax.random.uniform(k_x, (batch, SAMPLES_DIM), jnp.float32, -1.0, 1.0)
    t = jax.random.uniform(k_t, (batch, 1), jnp.float32, 0.0, 1.0)
    c = jax.random.randint(k_c, (batch, 1), 0, CLASS_NUM, jnp.int32)

    out = jax.block_until_ready(diffusion_forward(params, x, t, c))
    ref = jax.block_until_ready(diffusion_forward_ref(params, x, t, c))

    assert out.shape == (batch, SAMPLES_DIM)
    # bf16 MXU operands -> loosened tolerance vs the f32 reference.
    assert jnp.allclose(out, ref, atol=3e-2, rtol=3e-2), \
        f"mismatch vs JAX reference at batch={batch}"


if __name__ == "__main__":
    key = jax.random.PRNGKey(0)
    k_param, k_small, k_multi = jax.random.split(key, 3)

    params = init_params(k_param)

    _check(params, k_small, batch=8)       # single-chunk path
    _check(params, k_multi, batch=2500)    # padding + multi-chunk inner loop

    print("KERNEL_OK")
</pallas_src>

<mosaic_0001>
module attributes {stable_mosaic.version = 11 : i64} {
  func.func @diffusion_mlp_kernel(%arg0: i32, %arg1: memref<1x8x128xf32, #tpu.memory_space<vmem>>, %arg2: memref<16x8xf32, #tpu.memory_space<vmem>>, %arg3: memref<16x1xf32, #tpu.memory_space<vmem>>, %arg4: memref<16x16xf32, #tpu.memory_space<vmem>>, %arg5: memref<16x1xf32, #tpu.memory_space<vmem>>, %arg6: memref<16x16xf32, #tpu.memory_space<vmem>>, %arg7: memref<16x1xf32, #tpu.memory_space<vmem>>, %arg8: memref<2x16xf32, #tpu.memory_space<vmem>>, %arg9: memref<2x1xf32, #tpu.memory_space<vmem>>, %arg10: memref<1x2x128xf32, #tpu.memory_space<vmem>>) attributes {dimension_semantics = [#tpu.dimension_semantics<parallel>], iteration_bounds = array<i64: 1>, scalar_prefetch = 0 : i64, scratch_operands = 0 : i64, tpu.core_type = #tpu.core_type<tc>, window_params = [{transform_indices = @transform_0, window_bounds = array<i64: 1, 8, 128>}, {pipeline_mode = #tpu.pipeline_mode<synchronous>, transform_indices = @transform_1, window_bounds = array<i64: 16, 8>}, {pipeline_mode = #tpu.pipeline_mode<synchronous>, transform_indices = @transform_2, window_bounds = array<i64: 16, 1>}, {pipeline_mode = #tpu.pipeline_mode<synchronous>, transform_indices = @transform_3, window_bounds = array<i64: 16, 16>}, {pipeline_mode = #tpu.pipeline_mode<synchronous>, transform_indices = @transform_4, window_bounds = array<i64: 16, 1>}, {pipeline_mode = #tpu.pipeline_mode<synchronous>, transform_indices = @transform_5, window_bounds = array<i64: 16, 16>}, {pipeline_mode = #tpu.pipeline_mode<synchronous>, transform_indices = @transform_6, window_bounds = array<i64: 16, 1>}, {pipeline_mode = #tpu.pipeline_mode<synchronous>, transform_indices = @transform_7, window_bounds = array<i64: 2, 16>}, {pipeline_mode = #tpu.pipeline_mode<synchronous>, transform_indices = @transform_8, window_bounds = array<i64: 2, 1>}, {transform_indices = @transform_9, window_bounds = array<i64: 1, 2, 128>}]} {
    %c0 = arith.constant 0 : index
    %c0_0 = arith.constant 0 : index
    %0 = vector.load %arg2[%c0, %c0_0] : memref<16x8xf32, #tpu.memory_space<vmem>>, vector<16x8xf32>
    %1 = arith.truncf %0 : vector<16x8xf32> to vector<16x8xbf16>
    %c0_1 = arith.constant 0 : index
    %c0_2 = arith.constant 0 : index
    %2 = vector.load %arg4[%c0_1, %c0_2] : memref<16x16xf32, #tpu.memory_space<vmem>>, vector<16x16xf32>
    %3 = arith.truncf %2 : vector<16x16xf32> to vector<16x16xbf16>
    %c0_3 = arith.constant 0 : index
    %c0_4 = arith.constant 0 : index
    %4 = vector.load %arg6[%c0_3, %c0_4] : memref<16x16xf32, #tpu.memory_space<vmem>>, vector<16x16xf32>
    %5 = arith.truncf %4 : vector<16x16xf32> to vector<16x16xbf16>
    %c0_5 = arith.constant 0 : index
    %c0_6 = arith.constant 0 : index
    %6 = vector.load %arg8[%c0_5, %c0_6] : memref<2x16xf32, #tpu.memory_space<vmem>>, vector<2x16xf32>
    %7 = arith.truncf %6 : vector<2x16xf32> to vector<2x16xbf16>
    %c0_7 = arith.constant 0 : index
    %c0_8 = arith.constant 0 : index
    %8 = vector.load %arg3[%c0_7, %c0_8] : memref<16x1xf32, #tpu.memory_space<vmem>>, vector<16x1xf32>
    %c0_9 = arith.constant 0 : index
    %c0_10 = arith.constant 0 : index
    %9 = vector.load %arg5[%c0_9, %c0_10] : memref<16x1xf32, #tpu.memory_space<vmem>>, vector<16x1xf32>
    %c0_11 = arith.constant 0 : index
    %c0_12 = arith.constant 0 : index
    %10 = vector.load %arg7[%c0_11, %c0_12] : memref<16x1xf32, #tpu.memory_space<vmem>>, vector<16x1xf32>
    %c0_13 = arith.constant 0 : index
    %c0_14 = arith.constant 0 : index
    %11 = vector.load %arg9[%c0_13, %c0_14] : memref<2x1xf32, #tpu.memory_space<vmem>>, vector<2x1xf32>
    %c0_15 = arith.constant 0 : index
    %c0_16 = arith.constant 0 : index
    %c0_17 = arith.constant 0 : index
    %12 = vector.load %arg1[%c0_15, %c0_16, %c0_17] : memref<1x8x128xf32, #tpu.memory_space<vmem>>, vector<1x8x128xf32>
    %13 = vector.shape_cast %12 : vector<1x8x128xf32> to vector<8x128xf32>
    %14 = arith.truncf %13 : vector<8x128xf32> to vector<8x128xbf16>
    %cst = arith.constant dense<0.000000e+00> : vector<16x128xf32>
    %15 = tpu.matmul %1, %14, %cst {dimension_numbers = #tpu.dot_dimension_numbers<[1], [0], [0], [1], [0, 0, 1, 1], [], []>} : vector<16x8xbf16>, vector<8x128xbf16>, vector<16x128xf32> -> vector<16x128xf32>
    %16 = vector.broadcast %8 : vector<16x1xf32> to vector<16x128xf32>
    %17 = arith.addf %15, %16 : vector<16x128xf32>
    %cst_18 = arith.constant 0.000000e+00 : f32
    %18 = vector.broadcast %cst_18 : f32 to vector<16x128xf32>
    %19 = arith.cmpf ogt, %17, %18 : vector<16x128xf32>
    %cst_19 = arith.constant 0.00999999977 : f32
    %20 = vector.broadcast %cst_19 : f32 to vector<16x128xf32>
    %21 = arith.mulf %20, %17 : vector<16x128xf32>
    %22 = arith.select %19, %17, %21 : vector<16x128xi1>, vector<16x128xf32>
    %23 = arith.truncf %22 : vector<16x128xf32> to vector<16x128xbf16>
    %cst_20 = arith.constant dense<0.000000e+00> : vector<16x128xf32>
    %24 = tpu.matmul %3, %23, %cst_20 {dimension_numbers = #tpu.dot_dimension_numbers<[1], [0], [0], [1], [0, 0, 1, 1], [], []>} : vector<16x16xbf16>, vector<16x128xbf16>, vector<16x128xf32> -> vector<16x128xf32>
    %25 = vector.broadcast %9 : vector<16x1xf32> to vector<16x128xf32>
    %26 = arith.addf %24, %25 : vector<16x128xf32>
    %cst_21 = arith.constant 0.000000e+00 : f32
    %27 = vector.broadcast %cst_21 : f32 to vector<16x128xf32>
    %28 = arith.cmpf ogt, %26, %27 : vector<16x128xf32>
    %cst_22 = arith.constant 0.00999999977 : f32
    %29 = vector.broadcast %cst_22 : f32 to vector<16x128xf32>
    %30 = arith.mulf %29, %26 : vector<16x128xf32>
    %31 = arith.select %28, %26, %30 : vector<16x128xi1>, vector<16x128xf32>
    %32 = arith.truncf %31 : vector<16x128xf32> to vector<16x128xbf16>
    %cst_23 = arith.constant dense<0.000000e+00> : vector<16x128xf32>
    %33 = tpu.matmul %5, %32, %cst_23 {dimension_numbers = #tpu.dot_dimension_numbers<[1], [0], [0], [1], [0, 0, 1, 1], [], []>} : vector<16x16xbf16>, vector<16x128xbf16>, vector<16x128xf32> -> vector<16x128xf32>
    %34 = vector.broadcast %10 : vector<16x1xf32> to vector<16x128xf32>
    %35 = arith.addf %33, %34 : vector<16x128xf32>
    %cst_24 = arith.constant 0.000000e+00 : f32
    %36 = vector.broadcast %cst_24 : f32 to vector<16x128xf32>
    %37 = arith.cmpf ogt, %35, %36 : vector<16x128xf32>
    %cst_25 = arith.constant 0.00999999977 : f32
    %38 = vector.broadcast %cst_25 : f32 to vector<16x128xf32>
    %39 = arith.mulf %38, %35 : vector<16x128xf32>
    %40 = arith.select %37, %35, %39 : vector<16x128xi1>, vector<16x128xf32>
    %41 = arith.truncf %40 : vector<16x128xf32> to vector<16x128xbf16>
    %cst_26 = arith.constant dense<0.000000e+00> : vector<2x128xf32>
    %42 = tpu.matmul %7, %41, %cst_26 {dimension_numbers = #tpu.dot_dimension_numbers<[1], [0], [0], [1], [0, 0, 1, 1], [], []>} : vector<2x16xbf16>, vector<16x128xbf16>, vector<2x128xf32> -> vector<2x128xf32>
    %43 = vector.broadcast %11 : vector<2x1xf32> to vector<2x128xf32>
    %44 = arith.addf %42, %43 : vector<2x128xf32>
    %c0_27 = arith.constant 0 : index
    %c0_28 = arith.constant 0 : index
    %c0_29 = arith.constant 0 : index
    %45 = vector.load %arg10[%c0_27, %c0_28, %c0_29] : memref<1x2x128xf32, #tpu.memory_space<vmem>>, vector<1x2x128xf32>
    %46 = vector.shape_cast %45 : vector<1x2x128xf32> to vector<2x128xf32>
    %47 = vector.shape_cast %44 : vector<2x128xf32> to vector<1x2x128xf32>
    tpu.vector_store %arg10[%c0_27, %c0_28, %c0_29], %47 {strides = array<i32>} : memref<1x2x128xf32, #tpu.memory_space<vmem>>, vector<1x2x128xf32>,
    return
  }
  func.func @transform_0(%arg0: i32) -> (i32, i32, i32) {
    %c0_i32 = arith.constant 0 : i32
    %c0_i32_0 = arith.constant 0 : i32
    %c0_i32_1 = arith.constant 0 : i32
    return %arg0, %c0_i32, %c0_i32_0 : i32, i32, i32
  }
  func.func @transform_1(%arg0: i32) -> (i32, i32) {
    %c0_i32 = arith.constant 0 : i32
    %c0_i32_0 = arith.constant 0 : i32
    %c0_i32_1 = arith.constant 0 : i32
    return %c0_i32, %c0_i32_0 : i32, i32
  }
  func.func @transform_2(%arg0: i32) -> (i32, i32) {
    %c0_i32 = arith.constant 0 : i32
    %c0_i32_0 = arith.constant 0 : i32
    %c0_i32_1 = arith.constant 0 : i32
    return %c0_i32, %c0_i32_0 : i32, i32
  }
  func.func @transform_3(%arg0: i32) -> (i32, i32) {
    %c0_i32 = arith.constant 0 : i32
    %c0_i32_0 = arith.constant 0 : i32
    %c0_i32_1 = arith.constant 0 : i32
    return %c0_i32, %c0_i32_0 : i32, i32
  }
  func.func @transform_4(%arg0: i32) -> (i32, i32) {
    %c0_i32 = arith.constant 0 : i32
    %c0_i32_0 = arith.constant 0 : i32
    %c0_i32_1 = arith.constant 0 : i32
    return %c0_i32, %c0_i32_0 : i32, i32
  }
  func.func @transform_5(%arg0: i32) -> (i32, i32) {
    %c0_i32 = arith.constant 0 : i32
    %c0_i32_0 = arith.constant 0 : i32
    %c0_i32_1 = arith.constant 0 : i32
    return %c0_i32, %c0_i32_0 : i32, i32
  }
  func.func @transform_6(%arg0: i32) -> (i32, i32) {
    %c0_i32 = arith.constant 0 : i32
    %c0_i32_0 = arith.constant 0 : i32
    %c0_i32_1 = arith.constant 0 : i32
    return %c0_i32, %c0_i32_0 : i32, i32
  }
  func.func @transform_7(%arg0: i32) -> (i32, i32) {
    %c0_i32 = arith.constant 0 : i32
    %c0_i32_0 = arith.constant 0 : i32
    %c0_i32_1 = arith.constant 0 : i32
    return %c0_i32, %c0_i32_0 : i32, i32
  }
  func.func @transform_8(%arg0: i32) -> (i32, i32) {
    %c0_i32 = arith.constant 0 : i32
    %c0_i32_0 = arith.constant 0 : i32
    %c0_i32_1 = arith.constant 0 : i32
    return %c0_i32, %c0_i32_0 : i32, i32
  }
  func.func @transform_9(%arg0: i32) -> (i32, i32, i32) {
    %c0_i32 = arith.constant 0 : i32
    %c0_i32_0 = arith.constant 0 : i32
    %c0_i32_1 = arith.constant 0 : i32
    return %arg0, %c0_i32, %c0_i32_0 : i32, i32, i32
  }
}

</mosaic_0001>

<llo_original>
// kernel: tpu_custom_call.1
$region0: #{tpu_custom_call.1}
  #allocation0 [shape = 'u32[]', space=smem, size = 0x4, offset = 0x4, fixed_abs, tag = 'smem constant byte address 0x4 - core index']
  #allocation1 [shape = 'u32[72,128]{1,0:T(1,128)}', space=vmem, size = 0x9000, scoped, tag = 'internal scratch']
  %s0 = inlined_call_operand.vmem [shape: f32[1,8,128], index: 0, kind: input, shape index: {}]
  %s1 = inlined_call_operand.vmem [shape: f32[16,8], index: 1, kind: input, shape index: {}]
  %s2 = inlined_call_operand.vmem [shape: f32[16,1], index: 2, kind: input, shape index: {}]
  %s3 = inlined_call_operand.vmem [shape: f32[16,16], index: 3, kind: input, shape index: {}]
  %s4 = inlined_call_operand.vmem [shape: f32[16,1], index: 4, kind: input, shape index: {}]
  %s5 = inlined_call_operand.vmem [shape: f32[16,16], index: 5, kind: input, shape index: {}]
  %s6 = inlined_call_operand.vmem [shape: f32[16,1], index: 6, kind: input, shape index: {}]
  %s7 = inlined_call_operand.vmem [shape: f32[2,16], index: 7, kind: input, shape index: {}]
  %s8 = inlined_call_operand.vmem [shape: f32[2,1], index: 8, kind: input, shape index: {}]
  %s9 = inlined_call_operand.hbm [shape: f32[1,2,128], index: 9, kind: output, shape index: {}]
  %s10 = sld [smem:[#allocation0]]
  $region46: #{tpu_custom_call.1} parent=0
    _
  %s12 = ssub.s32 1, %s10
  %s13 = scalar_select 0, %s12, %s10
  $region1: #{tpu_custom_call.1} parent=0
    #allocation2 [shape = 'u8[1024]{0}', space=vmem, size = 0x400, scoped, tag = 'output window, operand 0, single buffered']
    #allocation3 [shape = 's32[1]{0}', space=sflag, size = 0x4, scoped, tag = 'scoped memory for tpu_custom_call.1']
    %14 = vsyncpa [#allocation3], 0
    // Predicated region
    $region2: #{tpu_custom_call.1} parent=1 // pred_check
      _
    $region3: #{tpu_custom_call.1} parent=1 // pred_check_branch
      %16 = sbr.rel (0) target = $region5
    $region4: #{tpu_custom_call.1} parent=1 // pred_region
      _
    $region5: #{tpu_custom_call.1} parent=1 // pred_fallthru
      _
    // Predicated region
    $region6: #{tpu_custom_call.1} parent=1 // pred_check
      _
    $region7: #{tpu_custom_call.1} parent=1 // pred_check_branch
      %18 = sbr.rel (0) target = $region9
    $region8: #{tpu_custom_call.1} parent=1 // pred_region
      _
    $region9: #{tpu_custom_call.1} parent=1 // pred_fallthru
      _
    // Predicated region
    $region10: #{tpu_custom_call.1} parent=1 // pred_check
      _
    $region11: #{tpu_custom_call.1} parent=1 // pred_check_branch
      %20 = sbr.rel (0) target = $region13
    $region12: #{tpu_custom_call.1} parent=1 // pred_region
      _
    $region13: #{tpu_custom_call.1} parent=1 // pred_fallthru
      _
    // Predicated region
    $region14: #{tpu_custom_call.1} parent=1 // pred_check
      _
    $region15: #{tpu_custom_call.1} parent=1 // pred_check_branch
      %22 = sbr.rel (0) target = $region17
    $region16: #{tpu_custom_call.1} parent=1 // pred_region
      _
    $region17: #{tpu_custom_call.1} parent=1 // pred_fallthru
      _
    // Predicated region
    $region18: #{tpu_custom_call.1} parent=1 // pred_check
      _
    $region19: #{tpu_custom_call.1} parent=1 // pred_check_branch
      %24 = sbr.rel (0) target = $region21
    $region20: #{tpu_custom_call.1} parent=1 // pred_region
      _
    $region21: #{tpu_custom_call.1} parent=1 // pred_fallthru
      _
    // Predicated region
    $region22: #{tpu_custom_call.1} parent=1 // pred_check
      _
    $region23: #{tpu_custom_call.1} parent=1 // pred_check_branch
      %26 = sbr.rel (0) target = $region25
    $region24: #{tpu_custom_call.1} parent=1 // pred_region
      _
    $region25: #{tpu_custom_call.1} parent=1 // pred_fallthru
      _
    // Predicated region
    $region26: #{tpu_custom_call.1} parent=1 // pred_check
      _
    $region27: #{tpu_custom_call.1} parent=1 // pred_check_branch
      %28 = sbr.rel (0) target = $region29
    $region28: #{tpu_custom_call.1} parent=1 // pred_region
      _
    $region29: #{tpu_custom_call.1} parent=1 // pred_fallthru
      _
    // Predicated region
    $region30: #{tpu_custom_call.1} parent=1 // pred_check
      _
    $region31: #{tpu_custom_call.1} parent=1 // pred_check_branch
      %30 = sbr.rel (0) target = $region33
    $region32: #{tpu_custom_call.1} parent=1 // pred_region
      _
    $region33: #{tpu_custom_call.1} parent=1 // pred_fallthru
      _
    // Predicated region
    $region34: #{tpu_custom_call.1} parent=1 // pred_check
      _
    $region35: #{tpu_custom_call.1} parent=1 // pred_check_branch
      %32 = sbr.rel (0) target = $region37
    $region36: #{tpu_custom_call.1} parent=1 // pred_region
      _
    $region37: #{tpu_custom_call.1} parent=1 // pred_fallthru
      _
    %v34 = vld [vmem:[%s1] sm:$0xff]
    %v35 = vld [vmem:[%s1 + $0x8] sm:$0xff]
    %v36 = vpack.c.bf16 %v35, %v34
    %v37 = vld [vmem:[%s3] sm:$0xff]
    %v38 = vld [vmem:[%s3 + $0x8] sm:$0xff]
    %v39 = vpack.c.bf16 %v38, %v37
    %v40 = vld [vmem:[%s5] sm:$0xff]
    %v41 = vld [vmem:[%s5 + $0x8] sm:$0xff]
    %v42 = vpack.c.bf16 %v41, %v40
    %v43 = vld [vmem:[%s7] sm:$0x3]
    %v44 = vpack.c.bf16 %v43, %v43
    %v45 = vld [vmem:[%s2] sm:$0xff]
    %v46 = vld [vmem:[%s2 + $0x8] sm:$0xff]
    %v47 = vld [vmem:[%s4] sm:$0xff]
    %v48 = vld [vmem:[%s4 + $0x8] sm:$0xff]
    %v49 = vld [vmem:[%s6] sm:$0xff]
    %v50 = vld [vmem:[%s6 + $0x8] sm:$0xff]
    %v51 = vld [vmem:[%s8] sm:$0x3]
    %v52 = vld [vmem:[%s0] sm:$0xff]
    %v53 = vpack.c.bf16 %v52, %v52
    %55 = vset.pattern.permute.xlu0 0
    %56 = vperm.xlu0 %55, %v45
    %v57 = vpop.permute.xlu0 %56
    %60 = vset.pattern.permute.xlu0 0
    %61 = vperm.xlu0 %60, %v46
    %v62 = vpop.permute.xlu0 %61
    %vm64 = vcmask 64512
    %v66 = vsel %vm64, %v36, 0
    %vm68 = vcmask 1043456
    %v70 = vsel %vm68, %v53, 0
    %72 = vmatpush.bf16.msra.mxu0 0
    %73 = vmatpush.bf16.msra.mxu0 0
    %74 = vmatpush.bf16.msra.mxu0 0
    %75 = vmatpush.bf16.msra.mxu0 0
    %76 = vmatpush.bf16.msra.mxu0 0
    %77 = vmatpush.bf16.msra.mxu0 0
    %78 = vmatpush.bf16.msra.mxu0 0
    %79 = vmatpush.bf16.msra.mxu0 %v70
    %80 = vmatmul.bf16.gmra.mxu0 %v66
    %v81 = vpop.f32.mrf.mxu0
    %v82 = vadd.f32 %v57, %v81
    %v83 = vpop.f32.mrf.mxu0
    %v84 = vadd.f32 %v62, %v83
    %85 = vdwg.mxu0
    %vm86 = vcmp.gt.f32.partialorder %v82, 0.0
    %vm87 = vcmp.gt.f32.partialorder %v84, 0.0
    %v88 = vmul.f32 %v82, 0.01
    %v89 = vmul.f32 %v84, 0.01
    %v90 = vsel %vm86, %v82, %v88
    %v91 = vsel %vm87, %v84, %v89
    %v92 = vpack.c.bf16 %v91, %v90
    %94 = vset.pattern.permute.xlu0 0
    %95 = vperm.xlu0 %94, %v47
    %v96 = vpop.permute.xlu0 %95
    %99 = vset.pattern.permute.xlu0 0
    %100 = vperm.xlu0 %99, %v48
    %v101 = vpop.permute.xlu0 %100
    %vm103 = vcmask 130048
    %v105 = vsel %vm103, %v39, 0
    %107 = vmatpush.bf16.msra.mxu0 0
    %108 = vmatpush.bf16.msra.mxu0 0
    %109 = vmatpush.bf16.msra.mxu0 0
    %110 = vmatpush.bf16.msra.mxu0 0
    %111 = vmatpush.bf16.msra.mxu0 0
    %112 = vmatpush.bf16.msra.mxu0 0
    %113 = vmatpush.bf16.msra.mxu0 0
    %114 = vmatpush.bf16.msra.mxu0 %v92
    %115 = vmatmul.bf16.gmra.mxu0 %v105
    %v116 = vpop.f32.mrf.mxu0
    %v117 = vadd.f32 %v96, %v116
    %v118 = vpop.f32.mrf.mxu0
    %v119 = vadd.f32 %v101, %v118
    %120 = vdwg.mxu0
    %vm121 = vcmp.gt.f32.partialorder %v117, 0.0
    %vm122 = vcmp.gt.f32.partialorder %v119, 0.0
    %v123 = vmul.f32 %v117, 0.01
    %v124 = vmul.f32 %v119, 0.01
    %v125 = vsel %vm121, %v117, %v123
    %v126 = vsel %vm122, %v119, %v124
    %v127 = vpack.c.bf16 %v126, %v125
    %129 = vset.pattern.permute.xlu0 0
    %130 = vperm.xlu0 %129, %v49
    %v131 = vpop.permute.xlu0 %130
    %134 = vset.pattern.permute.xlu0 0
    %135 = vperm.xlu0 %134, %v50
    %v136 = vpop.permute.xlu0 %135
    %v139 = vsel %vm103, %v42, 0
    %141 = vmatpush.bf16.msra.mxu0 0
    %142 = vmatpush.bf16.msra.mxu0 0
    %143 = vmatpush.bf16.msra.mxu0 0
    %144 = vmatpush.bf16.msra.mxu0 0
    %145 = vmatpush.bf16.msra.mxu0 0
    %146 = vmatpush.bf16.msra.mxu0 0
    %147 = vmatpush.bf16.msra.mxu0 0
    %148 = vmatpush.bf16.msra.mxu0 %v127
    %149 = vmatmul.bf16.gmra.mxu0 %v139
    %v150 = vpop.f32.mrf.mxu0
    %v151 = vadd.f32 %v131, %v150
    %v152 = vpop.f32.mrf.mxu0
    %v153 = vadd.f32 %v136, %v152
    %154 = vdwg.mxu0
    %vm155 = vcmp.gt.f32.partialorder %v151, 0.0
    %vm156 = vcmp.gt.f32.partialorder %v153, 0.0
    %v157 = vmul.f32 %v151, 0.01
    %v158 = vmul.f32 %v153, 0.01
    %v159 = vsel %vm155, %v151, %v157
    %v160 = vsel %vm156, %v153, %v158
    %v161 = vpack.c.bf16 %v160, %v159
    %163 = vset.pattern.permute.xlu0 0
    %164 = vperm.xlu0 %163, %v51
    %v165 = vpop.permute.xlu0 %164
    %v168 = vsel %vm103, %v44, 0
    %170 = vmatpush.bf16.msra.mxu0 0
    %171 = vmatpush.bf16.msra.mxu0 0
    %172 = vmatpush.bf16.msra.mxu0 0
    %173 = vmatpush.bf16.msra.mxu0 0
    %174 = vmatpush.bf16.msra.mxu0 0
    %175 = vmatpush.bf16.msra.mxu0 0
    %176 = vmatpush.bf16.msra.mxu0 0
    %177 = vmatpush.bf16.msra.mxu0 %v161
    %178 = vmatmul.bf16.gmra.mxu0 %v168
    %v179 = vpop.f32.mrf.mxu0
    %v180 = vadd.f32 %v165, %v179
    %v181 = vpop.f32.mrf.mxu0
    %182 = vdwg.mxu0
    %183 = vst [vmem:[#allocation2] sm:$0x3] %v180
    // Predicated region
    $region38: #{tpu_custom_call.1} parent=1 // pred_check
      _
    $region39: #{tpu_custom_call.1} parent=1 // pred_check_branch
      %185 = sbr.rel (0) target = $region41
    $region40: #{tpu_custom_call.1} parent=1 // pred_region
      %187 = vsyncadd [#allocation3], 0
      %s189 = sshll.u32 [#allocation2], 4
      %s190 = int_to_ptr.vmem [resolvable:$true] %s189
      %s191 = sshll.u32 %s9, 4
      %s192 = int_to_ptr.hbm [resolvable:$true] %s191
      %194 = dma.vmem_to_hbm [thread:$0]  %s190, 32, %s192, [#allocation3]
    $region41: #{tpu_custom_call.1} parent=1 // pred_fallthru
      _
    // Predicated region
    $region42: #{tpu_custom_call.1} parent=1 // pred_check
      _
    $region43: #{tpu_custom_call.1} parent=1 // pred_check_branch
      %196 = sbr.rel (0) target = $region45
    $region44: #{tpu_custom_call.1} parent=1 // pred_region
      %198 = dma.done [#allocation3], 32
    $region45: #{tpu_custom_call.1} parent=1 // pred_fallthru
      _
    %199 = vsyncpa [#allocation3], 1

</llo_original>
